<compile_context>
chip_gen: v5e
topology: v5e:2x2
jax: 0.10.0
libtpu: 0.0.40
codegen_flags: <defaults>
</compile_context>

<pallas_src>
import jax
import jax.numpy as jnp
from jax.experimental import pallas as pl
from jax.experimental.pallas import tpu as pltpu


def neg_grad_out_kernel(coord_t_ref, batch_ref, wft_ref, wg_ref, b1_ref,
                        w2_ref, b2_ref, res_ref, neg_grad_t_ref):
    coord_t = coord_t_ref[...]          # [3, Nt]  f32 (atoms on lanes)
    ids = batch_ref[...]                # [1, Nt]  i32 (padded lanes are -1)

    # ---- forward: h^T = W_fold^T @ coord^T + b1  (MXU; it is otherwise idle) ----
    h = jnp.dot(wft_ref[...], coord_t,
                preferred_element_type=jnp.float32) + b1_ref[...]      # [H, Nt]

    # sigmoid via a single EUP tanh; silu(h) = h * sig
    sig = 0.5 * jnp.tanh(0.5 * h) + 0.5                                # [H, Nt]
    act = h * sig                                                      # [H, Nt]

    # atom_out^T: H -> 1 reduction kept off the MXU (output width 1).
    atom = jnp.sum(act * w2_ref[...], axis=0, keepdims=True) + b2_ref[...]   # [1, Nt]

    # ---- scatter-sum via segment ids (per-tile partial, summed in wrapper) ----
    g = res_ref.shape[0]
    nt = atom.shape[1]
    gids = jax.lax.broadcasted_iota(jnp.int32, (g, nt), 0)             # [G, Nt]
    mask = (gids == ids).astype(jnp.float32)                           # padded lanes drop out
    res_ref[...] = jnp.sum(mask * atom, axis=1, keepdims=True)         # [G, 1]

    # ---- analytic neg-gradient, lane-dense [3, Nt] ----
    # silu'(h) = sig + h*sig*(1-sig) = sig + act*(1-sig)   (reuses act)
    dsilu = sig + act * (1.0 - sig)                                    # [H, Nt]
    # w2 and the negation are folded into wg in the wrapper.
    neg_grad_t_ref[...] = jnp.dot(wg_ref[...], dsilu,
                                  preferred_element_type=jnp.float32)  # [3, Nt]


def _pick_block_n(n, block_n):
    """Multiple of 128, >=128, and small enough that the grid has >=2 tiles
    when n allows it (so v7x's two TensorCores both get work)."""
    cap = 128 * max(1, pl.cdiv(n, 2 * 128))
    return max(128, min(block_n, cap))


def neg_grad_out(coord, batch, w_emb, w1, b1, w2, b2, *, num_graphs, block_n=2048):
    n = coord.shape[0]
    hidden = w1.shape[1]
    g = num_graphs

    block_n = _pick_block_n(n, block_n)
    num_tiles = pl.cdiv(n, block_n)
    n_pad = num_tiles * block_n

    # Fold the (linear stand-in) embedding into the first MLP layer.
    w_fold = (w_emb @ w1).astype(jnp.float32)                          # [3, H]
    wft = w_fold.T                                                     # [H, 3] (forward weight)
    w2_col = jnp.reshape(w2, (hidden, 1)).astype(jnp.float32)          # [H, 1]
    # Gradient weight with w2 and the final negation folded in:
    wg = (-(w_fold * jnp.reshape(w2, (1, hidden)))).astype(jnp.float32)  # [3, H]

    b1_col = jnp.reshape(b1, (hidden, 1)).astype(jnp.float32)
    b2_arr = jnp.reshape(b2, (1, 1)).astype(jnp.float32)

    # Transposed, padded inputs: atoms on the lane (last) axis.
    # Padding invariants: batch padded with -1 AND coord padded with finite 0s.
    coord_t = jnp.zeros((3, n_pad), jnp.float32).at[:, :n].set(coord.T)
    batch_p = jnp.full((1, n_pad), -1, jnp.int32).at[0, :n].set(batch.astype(jnp.int32))

    res_part, ng_t = pl.pallas_call(
        neg_grad_out_kernel,
        out_shape=(jax.ShapeDtypeStruct((num_tiles, g, 1), jnp.float32),
                   jax.ShapeDtypeStruct((3, n_pad), jnp.float32)),
        grid=(num_tiles,),
        in_specs=[
            pl.BlockSpec((3, block_n), lambda i: (0, i)),       # coord^T tile (streamed)
            pl.BlockSpec((1, block_n), lambda i: (0, i)),       # segment ids tile (streamed)
            pl.BlockSpec((hidden, 3), lambda i: (0, 0)),        # W_fold^T (VMEM resident)
            pl.BlockSpec((3, hidden), lambda i: (0, 0)),        # -(W_fold*w2) (VMEM resident)
            pl.BlockSpec((hidden, 1), lambda i: (0, 0)),        # b1
            pl.BlockSpec((hidden, 1), lambda i: (0, 0)),        # w2
            pl.BlockSpec((1, 1), lambda i: (0, 0)),             # b2
        ],
        out_specs=(
            pl.BlockSpec((None, g, 1), lambda i: (i, 0, 0)),    # per-tile partial res
            pl.BlockSpec((3, block_n), lambda i: (0, i)),       # neg_grad^T tile (lane-dense)
        ),
        compiler_params=pltpu.CompilerParams(
            dimension_semantics=("parallel",),                  # megacore split on v7x
            vmem_limit_bytes=32 * 1024 * 1024),                 # safe on v5e/v6e/v7x
    )(coord_t, batch_p, wft, wg, b1_col, w2_col, b2_arr)

    res = jnp.sum(res_part, axis=0)                             # [G, 1]
    neg_grad = ng_t.T[:n, :]                                    # [N, 3]
    return res, neg_grad


if __name__ == "__main__":
    # small, module-consistent shapes (multi-tile to exercise the grid + padding)
    N = 300           # number of atoms (nodes)
    G = 2             # number of graphs in the batch
    NODE_DIM = 128    # node_dim default
    HIDDEN_DIM = 64   # hidden_dim default
    NODE_BIAS = 0.0

    key = jax.random.PRNGKey(0)
    k_coord, k_emb, k_w1, k_w2 = jax.random.split(key, 4)

    coord = jax.random.normal(k_coord, (N, 3), dtype=jnp.float32)
    batch = jnp.concatenate([jnp.zeros((N // 2,), jnp.int32),
                             jnp.ones((N - N // 2,), jnp.int32)])          # [N]

    # deterministic parameter init (shapes from ScalarOut.__init__ with out_dim=1)
    w_emb = jax.random.normal(k_emb, (3, NODE_DIM), dtype=jnp.float32) * 0.1
    w1 = jax.random.normal(k_w1, (NODE_DIM, HIDDEN_DIM), dtype=jnp.float32) * (NODE_DIM ** -0.5)
    b1 = jnp.zeros((HIDDEN_DIM,), dtype=jnp.float32)                       # nn.init.zeros_
    w2 = jax.random.normal(k_w2, (HIDDEN_DIM, 1), dtype=jnp.float32) * (HIDDEN_DIM ** -0.5)
    b2 = jnp.full((1, 1), NODE_BIAS, dtype=jnp.float32)                    # nn.init.constant_(node_bias)

    res, neg_grad = jax.block_until_ready(
        neg_grad_out(coord, batch, w_emb, w1, b1, w2, b2, num_graphs=G))

    # pure-JAX f32 reference (autodiff through the linear stand-in)
    def atom_sum(c):
        x = c @ w_emb
        a = jax.nn.silu(x @ w1 + b1)
        atom = a @ w2 + b2
        return atom.sum(), atom

    grad_ref, atom_ref = jax.grad(atom_sum, has_aux=True)(coord)
    res_ref = jax.ops.segment_sum(atom_ref, batch, num_segments=G)

    assert res.shape == (G, 1) and neg_grad.shape == (N, 3)
    # conservative tolerance (MXU default-precision matmuls); numerics are
    # tighter than the previous bf16/approx-reciprocal version.
    assert jnp.allclose(res, res_ref, rtol=1e-2, atol=1e-2)
    assert jnp.allclose(neg_grad, -grad_ref, rtol=1e-2, atol=1e-2)

    print("KERNEL_OK")
</pallas_src>

<mosaic_0001>
module attributes {stable_mosaic.version = 11 : i64} {
  func.func @neg_grad_out_kernel(%arg0: i32, %arg1: memref<3x256xf32, #tpu.memory_space<vmem>>, %arg2: memref<1x256xi32, #tpu.memory_space<vmem>>, %arg3: memref<64x3xf32, #tpu.memory_space<vmem>>, %arg4: memref<3x64xf32, #tpu.memory_space<vmem>>, %arg5: memref<64x1xf32, #tpu.memory_space<vmem>>, %arg6: memref<64x1xf32, #tpu.memory_space<vmem>>, %arg7: memref<1x1xf32, #tpu.memory_space<vmem>>, %arg8: memref<1x2x1xf32, #tpu.memory_space<vmem>>, %arg9: memref<3x256xf32, #tpu.memory_space<vmem>>) attributes {dimension_semantics = [#tpu.dimension_semantics<parallel>], iteration_bounds = array<i64: 2>, scalar_prefetch = 0 : i64, scratch_operands = 0 : i64, tpu.core_type = #tpu.core_type<tc>, window_params = [{transform_indices = @transform_0, window_bounds = array<i64: 3, 256>}, {transform_indices = @transform_1, window_bounds = array<i64: 1, 256>}, {pipeline_mode = #tpu.pipeline_mode<synchronous>, transform_indices = @transform_2, window_bounds = array<i64: 64, 3>}, {pipeline_mode = #tpu.pipeline_mode<synchronous>, transform_indices = @transform_3, window_bounds = array<i64: 3, 64>}, {pipeline_mode = #tpu.pipeline_mode<synchronous>, transform_indices = @transform_4, window_bounds = array<i64: 64, 1>}, {pipeline_mode = #tpu.pipeline_mode<synchronous>, transform_indices = @transform_5, window_bounds = array<i64: 64, 1>}, {pipeline_mode = #tpu.pipeline_mode<synchronous>, transform_indices = @transform_6, window_bounds = array<i64: 1, 1>}, {transform_indices = @transform_7, window_bounds = array<i64: 1, 2, 1>}, {transform_indices = @transform_8, window_bounds = array<i64: 3, 256>}]} {
    %c0 = arith.constant 0 : index
    %c0_0 = arith.constant 0 : index
    %0 = vector.load %arg1[%c0, %c0_0] : memref<3x256xf32, #tpu.memory_space<vmem>>, vector<3x256xf32>
    %c0_1 = arith.constant 0 : index
    %c0_2 = arith.constant 0 : index
    %1 = vector.load %arg2[%c0_1, %c0_2] : memref<1x256xi32, #tpu.memory_space<vmem>>, vector<1x256xi32>
    %c0_3 = arith.constant 0 : index
    %c0_4 = arith.constant 0 : index
    %2 = vector.load %arg3[%c0_3, %c0_4] : memref<64x3xf32, #tpu.memory_space<vmem>>, vector<64x3xf32>
    %cst = arith.constant dense<0.000000e+00> : vector<64x256xf32>
    %3 = tpu.matmul %2, %0, %cst {dimension_numbers = #tpu.dot_dimension_numbers<[1], [0], [0], [1], [0, 0, 1, 1], [], []>} : vector<64x3xf32>, vector<3x256xf32>, vector<64x256xf32> -> vector<64x256xf32>
    %c0_5 = arith.constant 0 : index
    %c0_6 = arith.constant 0 : index
    %4 = vector.load %arg5[%c0_5, %c0_6] : memref<64x1xf32, #tpu.memory_space<vmem>>, vector<64x1xf32>
    %5 = vector.broadcast %4 : vector<64x1xf32> to vector<64x256xf32>
    %6 = arith.addf %3, %5 : vector<64x256xf32>
    %cst_7 = arith.constant 5.000000e-01 : f32
    %7 = vector.broadcast %cst_7 : f32 to vector<64x256xf32>
    %8 = arith.mulf %7, %6 : vector<64x256xf32>
    %9 = math.tanh %8 : vector<64x256xf32>
    %cst_8 = arith.constant 5.000000e-01 : f32
    %10 = vector.broadcast %cst_8 : f32 to vector<64x256xf32>
    %11 = arith.mulf %10, %9 : vector<64x256xf32>
    %cst_9 = arith.constant 5.000000e-01 : f32
    %12 = vector.broadcast %cst_9 : f32 to vector<64x256xf32>
    %13 = arith.addf %11, %12 : vector<64x256xf32>
    %14 = arith.mulf %6, %13 : vector<64x256xf32>
    %c0_10 = arith.constant 0 : index
    %c0_11 = arith.constant 0 : index
    %15 = vector.load %arg6[%c0_10, %c0_11] : memref<64x1xf32, #tpu.memory_space<vmem>>, vector<64x1xf32>
    %16 = vector.broadcast %15 : vector<64x1xf32> to vector<64x256xf32>
    %17 = arith.mulf %14, %16 : vector<64x256xf32>
    %cst_12 = arith.constant dense<0.000000e+00> : vector<256xf32>
    %18 = vector.multi_reduction <add>, %17, %cst_12 [0] : vector<64x256xf32> to vector<256xf32>
    %19 = vector.shape_cast %18 : vector<256xf32> to vector<1x256xf32>
    %c0_13 = arith.constant 0 : index
    %c0_14 = arith.constant 0 : index
    %20 = vector.load %arg7[%c0_13, %c0_14] : memref<1x1xf32, #tpu.memory_space<vmem>>, vector<1x1xf32>
    %21 = vector.broadcast %20 : vector<1x1xf32> to vector<1x256xf32>
    %22 = arith.addf %19, %21 : vector<1x256xf32>
    %23 = tpu.iota {dimensions = array<i32: 0>} : vector<2x256xi32>
    %24 = vector.broadcast %1 : vector<1x256xi32> to vector<2x256xi32>
    %25 = arith.cmpi eq, %23, %24 : vector<2x256xi32>
    %26 = arith.extui %25 : vector<2x256xi1> to vector<2x256xi32>
    %27 = arith.sitofp %26 : vector<2x256xi32> to vector<2x256xf32>
    %28 = vector.broadcast %22 : vector<1x256xf32> to vector<2x256xf32>
    %29 = arith.mulf %27, %28 : vector<2x256xf32>
    %cst_15 = arith.constant dense<0.000000e+00> : vector<2xf32>
    %30 = vector.multi_reduction <add>, %29, %cst_15 [1] : vector<2x256xf32> to vector<2xf32>
    %31 = vector.shape_cast %30 : vector<2xf32> to vector<2x1xf32>
    %c0_16 = arith.constant 0 : index
    %c0_17 = arith.constant 0 : index
    %c0_18 = arith.constant 0 : index
    %32 = vector.load %arg8[%c0_16, %c0_17, %c0_18] : memref<1x2x1xf32, #tpu.memory_space<vmem>>, vector<1x2x1xf32>
    %33 = vector.shape_cast %32 : vector<1x2x1xf32> to vector<2x1xf32>
    %34 = vector.shape_cast %31 : vector<2x1xf32> to vector<1x2x1xf32>
    tpu.vector_store %arg8[%c0_16, %c0_17, %c0_18], %34 {strides = array<i32>} : memref<1x2x1xf32, #tpu.memory_space<vmem>>, vector<1x2x1xf32>,
    %cst_19 = arith.constant 1.000000e+00 : f32
    %35 = vector.broadcast %cst_19 : f32 to vector<64x256xf32>
    %36 = arith.subf %35, %13 : vector<64x256xf32>
    %37 = arith.mulf %14, %36 : vector<64x256xf32>
    %38 = arith.addf %13, %37 : vector<64x256xf32>
    %c0_20 = arith.constant 0 : index
    %c0_21 = arith.constant 0 : index
    %39 = vector.load %arg4[%c0_20, %c0_21] : memref<3x64xf32, #tpu.memory_space<vmem>>, vector<3x64xf32>
    %cst_22 = arith.constant dense<0.000000e+00> : vector<3x256xf32>
    %40 = tpu.matmul %39, %38, %cst_22 {dimension_numbers = #tpu.dot_dimension_numbers<[1], [0], [0], [1], [0, 0, 1, 1], [], []>} : vector<3x64xf32>, vector<64x256xf32>, vector<3x256xf32> -> vector<3x256xf32>
    %c0_23 = arith.constant 0 : index
    %c0_24 = arith.constant 0 : index
    %41 = vector.load %arg9[%c0_23, %c0_24] : memref<3x256xf32, #tpu.memory_space<vmem>>, vector<3x256xf32>
    tpu.vector_store %arg9[%c0_23, %c0_24], %40 {strides = array<i32>} : memref<3x256xf32, #tpu.memory_space<vmem>>, vector<3x256xf32>,
    return
  }
  func.func @transform_0(%arg0: i32) -> (i32, i32) {
    %c0_i32 = arith.constant 0 : i32
    %c0_i32_0 = arith.constant 0 : i32
    return %c0_i32, %arg0 : i32, i32
  }
  func.func @transform_1(%arg0: i32) -> (i32, i32) {
    %c0_i32 = arith.constant 0 : i32
    %c0_i32_0 = arith.constant 0 : i32
    return %c0_i32, %arg0 : i32, i32
  }
  func.func @transform_2(%arg0: i32) -> (i32, i32) {
    %c0_i32 = arith.constant 0 : i32
    %c0_i32_0 = arith.constant 0 : i32
    %c0_i32_1 = arith.constant 0 : i32
    return %c0_i32, %c0_i32_0 : i32, i32
  }
  func.func @transform_3(%arg0: i32) -> (i32, i32) {
    %c0_i32 = arith.constant 0 : i32
    %c0_i32_0 = arith.constant 0 : i32
    %c0_i32_1 = arith.constant 0 : i32
    return %c0_i32, %c0_i32_0 : i32, i32
  }
  func.func @transform_4(%arg0: i32) -> (i32, i32) {
    %c0_i32 = arith.constant 0 : i32
    %c0_i32_0 = arith.constant 0 : i32
    %c0_i32_1 = arith.constant 0 : i32
    return %c0_i32, %c0_i32_0 : i32, i32
  }
  func.func @transform_5(%arg0: i32) -> (i32, i32) {
    %c0_i32 = arith.constant 0 : i32
    %c0_i32_0 = arith.constant 0 : i32
    %c0_i32_1 = arith.constant 0 : i32
    return %c0_i32, %c0_i32_0 : i32, i32
  }
  func.func @transform_6(%arg0: i32) -> (i32, i32) {
    %c0_i32 = arith.constant 0 : i32
    %c0_i32_0 = arith.constant 0 : i32
    %c0_i32_1 = arith.constant 0 : i32
    return %c0_i32, %c0_i32_0 : i32, i32
  }
  func.func @transform_7(%arg0: i32) -> (i32, i32, i32) {
    %c0_i32 = arith.constant 0 : i32
    %c0_i32_0 = arith.constant 0 : i32
    %c0_i32_1 = arith.constant 0 : i32
    return %arg0, %c0_i32, %c0_i32_0 : i32, i32, i32
  }
  func.func @transform_8(%arg0: i32) -> (i32, i32) {
    %c0_i32 = arith.constant 0 : i32
    %c0_i32_0 = arith.constant 0 : i32
    return %c0_i32, %arg0 : i32, i32
  }
}

</mosaic_0001>

<llo_original>
// kernel: tpu_custom_call.1
$region0: #{tpu_custom_call.1}
  #allocation0 [shape = 'u32[]', space=smem, size = 0x4, offset = 0x4, fixed_abs, tag = 'smem constant byte address 0x4 - core index']
  #allocation1 [shape = 'u32[72,128]{1,0:T(1,128)}', space=vmem, size = 0x9000, scoped, tag = 'internal scratch']
  #allocation2 [shape = 'f32[1,1]{1,0:T(1,128)S(1)}', space=vmem, size = 0x200, scoped, tag = 'scoped memory for tpu_custom_call.1']
  %s0 = inlined_call_operand.vmem [shape: f32[3,512], index: 0, kind: input, shape index: {}]
  %s1 = inlined_call_operand.vmem [shape: s32[1,512], index: 1, kind: input, shape index: {}]
  %s2 = inlined_call_operand.vmem [shape: f32[64,3], index: 2, kind: input, shape index: {}]
  %s3 = inlined_call_operand.vmem [shape: f32[3,64], index: 3, kind: input, shape index: {}]
  %s4 = inlined_call_operand.vmem [shape: f32[64,1], index: 4, kind: input, shape index: {}]
  %s5 = inlined_call_operand.vmem [shape: f32[64,1], index: 5, kind: input, shape index: {}]
  %s6 = inlined_call_operand.<no memory space> [shape: f32[1,1], index: 6, kind: input, shape index: {}]
  %s7 = inlined_call_operand.vmem [shape: f32[2,2,1], index: 7, kind: output, shape index: {0}]
  %s8 = inlined_call_operand.hbm [shape: f32[3,512], index: 8, kind: output, shape index: {1}]
  %9 = xla_tuple %s7, %s8
  %s10 = sld [smem:[#allocation0]]
  $region69: #{tpu_custom_call.1} parent=0
    _
  %s12 = ssub.s32 1, %s10
  %s13 = scalar_select 0, %s12, %s10
  %v14 = vstv %s6
  %15 = vst [vmem:[#allocation2] sm:$0x1] %v14
  $region1: #{tpu_custom_call.1} parent=0
    #allocation3 [shape = 'u8[8192]{0}', space=vmem, size = 0x2000, scoped, tag = 'output window, operand 1']
    #allocation4 [shape = 's32[2]{0}', space=sflag, size = 0x8, scoped, tag = 'scoped memory for tpu_custom_call.1']
    %16 = vsyncpa [#allocation4], 0
    %s17 = scalar_lea.sflag [#allocation4], 1
    %18 = vsyncpa %s17, 0
    loop: start=0, step=1, limit=4
    $region2: #{tpu_custom_call.1} parent=1 // loop_pre_header
      _
    $region3: #{tpu_custom_call.1} parent=1 // loop_header
      %s20 = sphi 0, %s24
      %p21 = scmp.ge.s32.totalorder %s20, 4
      %s30 = sphi 0, %s32
      %s33 = sphi 0, %s30
      %s34 = sphi 0, %s33
      %s50 = sphi 0, %s34
      %s56 = sphi 0, %s58
      %s59 = sphi 0, %s56
      %s60 = sphi 0, %s59
      %s76 = sphi 0, %s60
      %s80 = sphi 0, %s80
      %s82 = sphi 0, %s80
      %s83 = sphi 0, %s82
      %s97 = sphi 0, %s83
      %s101 = sphi 0, %s101
      %s103 = sphi 0, %s101
      %s104 = sphi 0, %s103
      %s118 = sphi 0, %s104
      %s122 = sphi 0, %s122
      %s124 = sphi 0, %s122
      %s125 = sphi 0, %s124
      %s139 = sphi 0, %s125
      %s143 = sphi 0, %s143
      %s145 = sphi 0, %s143
      %s146 = sphi 0, %s145
      %s160 = sphi 0, %s146
      %s164 = sphi 0, %s164
      %s166 = sphi 0, %s164
      %s167 = sphi 0, %s166
      %s181 = sphi 0, %s167
      %s187 = sphi 0, %s189
      %s190 = sphi 0, %s187
      %s191 = sphi 0, %s190
      %s207 = sphi 0, %s191
      %s213 = sphi 0, %s215
      %s216 = sphi 0, %s213
      %s217 = sphi 0, %s216
      %s233 = sphi 0, %s217
    $region4: #{tpu_custom_call.1} parent=1 // loop_header_branch
      %23 = sbr.rel (%p21) target = $region8
    $region5: #{tpu_custom_call.1} parent=1 // loop_body
      %s25 = ssub.s32 %s20, 1
      %s26 = ssub.s32 %s20, 2
      %s27 = sadd.s32 %s20, 1
      %s28 = ssub.s32 %s20, %s27
      %p29 = scmp.eq.s32.totalorder %s28, 0
      %s31 = sadd.s32 %s30, 1
      %s32 = scalar_select %p29, %s30, %s31
      %p35 = pneg %p29
      %p36 = scmp.eq.s32.totalorder %s20, 1
      %p37 = por %p35, %p36
      %p38 = scmp.ne.s32.totalorder %s30, %s33
      %p39 = scmp.eq.s32.totalorder %s20, 0
      %p40 = por %p38, %p39
      %p41 = scmp.ne.s32.totalorder %s30, %s33
      %p42 = scmp.eq.s32.totalorder %s25, 1
      %p43 = por %p41, %p42
      %p44 = scmp.ne.s32.totalorder %s33, %s34
      %p45 = scmp.eq.s32.totalorder %s25, 0
      %p46 = por %p44, %p45
      %p47 = scmp.ne.s32.totalorder %s33, %s34
      %p48 = scmp.eq.s32.totalorder %s26, 1
      %p49 = por %p47, %p48
      %p51 = scmp.ne.s32.totalorder %s34, %s50
      %p52 = scmp.eq.s32.totalorder %s26, 0
      %p53 = por %p51, %p52
      %s54 = ssub.s32 %s20, %s27
      %p55 = scmp.eq.s32.totalorder %s54, 0
      %s57 = sadd.s32 %s56, 1
      %s58 = scalar_select %p55, %s56, %s57
      %p61 = pneg %p55
      %p62 = scmp.eq.s32.totalorder %s20, 1
      %p63 = por %p61, %p62
      %p64 = scmp.ne.s32.totalorder %s56, %s59
      %p65 = scmp.eq.s32.totalorder %s20, 0
      %p66 = por %p64, %p65
      %p67 = scmp.ne.s32.totalorder %s56, %s59
      %p68 = scmp.eq.s32.totalorder %s25, 1
      %p69 = por %p67, %p68
      %p70 = scmp.ne.s32.totalorder %s59, %s60
      %p71 = scmp.eq.s32.totalorder %s25, 0
      %p72 = por %p70, %p71
      %p73 = scmp.ne.s32.totalorder %s59, %s60
      %p74 = scmp.eq.s32.totalorder %s26, 1
      %p75 = por %p73, %p74
      %p77 = scmp.ne.s32.totalorder %s60, %s76
      %p78 = scmp.eq.s32.totalorder %s26, 0
      %p79 = por %p77, %p78
      %s81 = sadd.s32 %s80, 1
      %p84 = scmp.eq.s32.totalorder %s20, 1
      %p85 = scmp.ne.s32.totalorder %s80, %s82
      %p86 = scmp.eq.s32.totalorder %s20, 0
      %p87 = por %p85, %p86
      %p88 = scmp.ne.s32.totalorder %s80, %s82
      %p89 = scmp.eq.s32.totalorder %s25, 1
      %p90 = por %p88, %p89
      %p91 = scmp.ne.s32.totalorder %s82, %s83
      %p92 = scmp.eq.s32.totalorder %s25, 0
      %p93 = por %p91, %p92
      %p94 = scmp.ne.s32.totalorder %s82, %s83
      %p95 = scmp.eq.s32.totalorder %s26, 1
      %p96 = por %p94, %p95
      %p98 = scmp.ne.s32.totalorder %s83, %s97
      %p99 = scmp.eq.s32.totalorder %s26, 0
      %p100 = por %p98, %p99
      %s102 = sadd.s32 %s101, 1
      %p105 = scmp.eq.s32.totalorder %s20, 1
      %p106 = scmp.ne.s32.totalorder %s101, %s103
      %p107 = scmp.eq.s32.totalorder %s20, 0
      %p108 = por %p106, %p107
      %p109 = scmp.ne.s32.totalorder %s101, %s103
      %p110 = scmp.eq.s32.totalorder %s25, 1
      %p111 = por %p109, %p110
      %p112 = scmp.ne.s32.totalorder %s103, %s104
      %p113 = scmp.eq.s32.totalorder %s25, 0
      %p114 = por %p112, %p113
      %p115 = scmp.ne.s32.totalorder %s103, %s104
      %p116 = scmp.eq.s32.totalorder %s26, 1
      %p117 = por %p115, %p116
      %p119 = scmp.ne.s32.totalorder %s104, %s118
      %p120 = scmp.eq.s32.totalorder %s26, 0
      %p121 = por %p119, %p120
      %s123 = sadd.s32 %s122, 1
      %p126 = scmp.eq.s32.totalorder %s20, 1
      %p127 = scmp.ne.s32.totalorder %s122, %s124
      %p128 = scmp.eq.s32.totalorder %s20, 0
      %p129 = por %p127, %p128
      %p130 = scmp.ne.s32.totalorder %s122, %s124
      %p131 = scmp.eq.s32.totalorder %s25, 1
      %p132 = por %p130, %p131
      %p133 = scmp.ne.s32.totalorder %s124, %s125
      %p134 = scmp.eq.s32.totalorder %s25, 0
      %p135 = por %p133, %p134
      %p136 = scmp.ne.s32.totalorder %s124, %s125
      %p137 = scmp.eq.s32.totalorder %s26, 1
      %p138 = por %p136, %p137
      %p140 = scmp.ne.s32.totalorder %s125, %s139
      %p141 = scmp.eq.s32.totalorder %s26, 0
      %p142 = por %p140, %p141
      %s144 = sadd.s32 %s143, 1
      %p147 = scmp.eq.s32.totalorder %s20, 1
      %p148 = scmp.ne.s32.totalorder %s143, %s145
      %p149 = scmp.eq.s32.totalorder %s20, 0
      %p150 = por %p148, %p149
      %p151 = scmp.ne.s32.totalorder %s143, %s145
      %p152 = scmp.eq.s32.totalorder %s25, 1
      %p153 = por %p151, %p152
      %p154 = scmp.ne.s32.totalorder %s145, %s146
      %p155 = scmp.eq.s32.totalorder %s25, 0
      %p156 = por %p154, %p155
      %p157 = scmp.ne.s32.totalorder %s145, %s146
      %p158 = scmp.eq.s32.totalorder %s26, 1
      %p159 = por %p157, %p158
      %p161 = scmp.ne.s32.totalorder %s146, %s160
      %p162 = scmp.eq.s32.totalorder %s26, 0
      %p163 = por %p161, %p162
      %s165 = sadd.s32 %s164, 1
      %p168 = scmp.eq.s32.totalorder %s20, 1
      %p169 = scmp.ne.s32.totalorder %s164, %s166
      %p170 = scmp.eq.s32.totalorder %s20, 0
      %p171 = por %p169, %p170
      %p172 = scmp.ne.s32.totalorder %s164, %s166
      %p173 = scmp.eq.s32.totalorder %s25, 1
      %p174 = por %p172, %p173
      %p175 = scmp.ne.s32.totalorder %s166, %s167
      %p176 = scmp.eq.s32.totalorder %s25, 0
      %p177 = por %p175, %p176
      %p178 = scmp.ne.s32.totalorder %s166, %s167
      %p179 = scmp.eq.s32.totalorder %s26, 1
      %p180 = por %p178, %p179
      %p182 = scmp.ne.s32.totalorder %s167, %s181
      %p183 = scmp.eq.s32.totalorder %s26, 0
      %p184 = por %p182, %p183
      %s185 = ssub.s32 %s20, %s27
      %p186 = scmp.eq.s32.totalorder %s185, 0
      %s188 = sadd.s32 %s187, 1
      %s189 = scalar_select %p186, %s187, %s188
      %p192 = pneg %p186
      %p193 = scmp.eq.s32.totalorder %s20, 1
      %p194 = por %p192, %p193
      %p195 = scmp.ne.s32.totalorder %s187, %s190
      %p196 = scmp.eq.s32.totalorder %s20, 0
      %p197 = por %p195, %p196
      %p198 = scmp.ne.s32.totalorder %s187, %s190
      %p199 = scmp.eq.s32.totalorder %s25, 1
      %p200 = por %p198, %p199
      %p201 = scmp.ne.s32.totalorder %s190, %s191
      %p202 = scmp.eq.s32.totalorder %s25, 0
      %p203 = por %p201, %p202
      %p204 = scmp.ne.s32.totalorder %s190, %s191
      %p205 = scmp.eq.s32.totalorder %s26, 1
      %p206 = por %p204, %p205
      %p208 = scmp.ne.s32.totalorder %s191, %s207
      %p209 = scmp.eq.s32.totalorder %s26, 0
      %p210 = por %p208, %p209
      %s211 = ssub.s32 %s20, %s27
      %p212 = scmp.eq.s32.totalorder %s211, 0
      %s214 = sadd.s32 %s213, 1
      %s215 = scalar_select %p212, %s213, %s214
      %p218 = pneg %p212
      %p219 = scmp.eq.s32.totalorder %s20, 1
      %p220 = por %p218, %p219
      %p221 = scmp.ne.s32.totalorder %s213, %s216
      %p222 = scmp.eq.s32.totalorder %s20, 0
      %p223 = por %p221, %p222
      %p224 = scmp.ne.s32.totalorder %s213, %s216
      %p225 = scmp.eq.s32.totalorder %s25, 1
      %p226 = por %p224, %p225
      %p227 = scmp.ne.s32.totalorder %s216, %s217
      %p228 = scmp.eq.s32.totalorder %s25, 0
      %p229 = por %p227, %p228
      %p230 = scmp.ne.s32.totalorder %s216, %s217
      %p231 = scmp.eq.s32.totalorder %s26, 1
      %p232 = por %p230, %p231
      %p234 = scmp.ne.s32.totalorder %s217, %s233
      %p235 = scmp.eq.s32.totalorder %s26, 0
      %p236 = por %p234, %p235
      %p237 = scmp.le.s32.totalorder 1, %s20
      %p238 = scmp.lt.s32.totalorder %s20, 3
      %p239 = pnand %p237, %p238
      %p240 = pneg %p239
      // Predicated region
      $region9: #{tpu_custom_call.1} parent=5 // pred_check
        _
      $region10: #{tpu_custom_call.1} parent=5 // pred_check_branch
        %242 = sbr.rel (%p239) target = $region12
      $region11: #{tpu_custom_call.1} parent=5 // pred_region
        %s243 = ssub.s32 %s20, 1
        // Predicated region
        $region13: #{tpu_custom_call.1} parent=11 // pred_check
          %p244 = pneg %p93
        $region14: #{tpu_custom_call.1} parent=11 // pred_check_branch
          %246 = sbr.rel (%p244) target = $region16
        $region15: #{tpu_custom_call.1} parent=11 // pred_region
          _
        $region16: #{tpu_custom_call.1} parent=11 // pred_fallthru
          _
        // Predicated region
        $region17: #{tpu_custom_call.1} parent=11 // pred_check
          %p247 = pneg %p114
        $region18: #{tpu_custom_call.1} parent=11 // pred_check_branch
          %249 = sbr.rel (%p247) target = $region20
        $region19: #{tpu_custom_call.1} parent=11 // pred_region
          _
        $region20: #{tpu_custom_call.1} parent=11 // pred_fallthru
          _
        // Predicated region
        $region21: #{tpu_custom_call.1} parent=11 // pred_check
          %p250 = pneg %p135
        $region22: #{tpu_custom_call.1} parent=11 // pred_check_branch
          %252 = sbr.rel (%p250) target = $region24
        $region23: #{tpu_custom_call.1} parent=11 // pred_region
          _
        $region24: #{tpu_custom_call.1} parent=11 // pred_fallthru
          _
        // Predicated region
        $region25: #{tpu_custom_call.1} parent=11 // pred_check
          %p253 = pneg %p156
        $region26: #{tpu_custom_call.1} parent=11 // pred_check_branch
          %255 = sbr.rel (%p253) target = $region28
        $region27: #{tpu_custom_call.1} parent=11 // pred_region
          _
        $region28: #{tpu_custom_call.1} parent=11 // pred_fallthru
          _
        // Predicated region
        $region29: #{tpu_custom_call.1} parent=11 // pred_check
          %p256 = pneg %p177
        $region30: #{tpu_custom_call.1} parent=11 // pred_check_branch
          %258 = sbr.rel (%p256) target = $region32
        $region31: #{tpu_custom_call.1} parent=11 // pred_region
          _
        $region32: #{tpu_custom_call.1} parent=11 // pred_fallthru
          _
      $region12: #{tpu_custom_call.1} parent=5 // pred_fallthru
        _
      %p259 = scmp.lt.s32.totalorder %s20, 2
      // Predicated region
      $region33: #{tpu_custom_call.1} parent=5 // pred_check
        %p260 = pneg %p259
      $region34: #{tpu_custom_call.1} parent=5 // pred_check_branch
        %262 = sbr.rel (%p260) target = $region36
      $region35: #{tpu_custom_call.1} parent=5 // pred_region
        // Predicated region
        $region37: #{tpu_custom_call.1} parent=35 // pred_check
          %p263 = pneg %p40
        $region38: #{tpu_custom_call.1} parent=35 // pred_check_branch
          %265 = sbr.rel (%p263) target = $region40
        $region39: #{tpu_custom_call.1} parent=35 // pred_region
          %s266 = smul.u32 2, %s20
          %p267 = scmp.lt.s32.totalorder %s266, 3
          %s268 = scalar_select %p267, %s266, 3
          %s269 = smul.addr %s268, 4
          %s270 = scalar_lea.vmem %s0, %s269
          %s271 = smul.u32 2, %s20
        $region40: #{tpu_custom_call.1} parent=35 // pred_fallthru
          _
        // Predicated region
        $region41: #{tpu_custom_call.1} parent=35 // pred_check
          %p272 = pneg %p66
        $region42: #{tpu_custom_call.1} parent=35 // pred_check_branch
          %274 = sbr.rel (%p272) target = $region44
        $region43: #{tpu_custom_call.1} parent=35 // pred_region
          %s275 = smul.u32 2, %s20
          %p276 = scmp.lt.s32.totalorder %s275, 3
          %s277 = scalar_select %p276, %s275, 3
          %s278 = scalar_lea.vmem %s1, %s277
          %s279 = smul.u32 2, %s20
        $region44: #{tpu_custom_call.1} parent=35 // pred_fallthru
          _
      $region36: #{tpu_custom_call.1} parent=5 // pred_fallthru
        _
      %p280 = scmp.le.s32.totalorder 1, %s20
      %p281 = scmp.lt.s32.totalorder %s20, 3
      %p282 = pnand %p280, %p281
      %p283 = pneg %p282
      // Predicated region
      $region45: #{tpu_custom_call.1} parent=5 // pred_check
        _
      $region46: #{tpu_custom_call.1} parent=5 // pred_check_branch
        %285 = sbr.rel (%p282) target = $region48
      $region47: #{tpu_custom_call.1} parent=5 // pred_region
        %s286 = ssub.s32 %s20, 1
        %s287 = smul.u32 2, %s25
        %p288 = scmp.lt.s32.totalorder %s287, 3
        %s289 = scalar_select %p288, %s287, 3
        %s290 = smul.addr %s289, 4
        %s291 = scalar_lea.vmem %s0, %s290
        %p292 = pneg %p46
        %p293 = pneg %p43
        %s294 = smul.u32 2, %s25
        %p295 = scmp.lt.s32.totalorder %s294, 3
        %s296 = scalar_select %p295, %s294, 3
        %s297 = scalar_lea.vmem %s1, %s296
        %p298 = pneg %p72
        %p299 = pneg %p69
        %p300 = pneg %p93
        %p301 = pneg %p90
        %p302 = pneg %p114
        %p303 = pneg %p111
        %p304 = pneg %p135
        %p305 = pneg %p132
        %p306 = pneg %p156
        %p307 = pneg %p153
        %p308 = pneg %p177
        %p309 = pneg %p174
        %p310 = pneg %p203
        %p311 = pneg %p200
        %p312 = scmp.lt.s32.totalorder %s25, 1
        %s313 = scalar_select %p312, %s25, 1
        %s314 = smul.addr %s313, 2
        %s315 = scalar_lea.vmem %s7, %s314
        %p316 = pneg %p229
        %p317 = pneg %p226
        %s318 = sand.u32 %s216, 1
        %s319 = scalar_lea.sflag [#allocation4], %s318
        %s320 = sand.u32 %s216, 1
        %s321 = smul.addr %s320, 8
        %s322 = scalar_lea.vmem [#allocation3], %s321
        %s323 = smul.u32 2, %s25
        %p324 = scmp.lt.s32.totalorder %s323, 3
        %s325 = scalar_select %p324, %s323, 3
        %s326 = smul.addr %s325, 4
        %s327 = scalar_lea.vmem %s0, %s326
        %s328 = smul.u32 2, %s25
        %s329 = smul.u32 2, %s25
        %p330 = scmp.lt.s32.totalorder %s329, 3
        %s331 = scalar_select %p330, %s329, 3
        %s332 = scalar_lea.vmem %s1, %s331
        %s333 = smul.u32 2, %s25
        %p334 = scmp.lt.s32.totalorder %s25, 1
        %s335 = scalar_select %p334, %s25, 1
        %s336 = smul.addr %s335, 2
        %s337 = scalar_lea.vmem %s7, %s336
        %s338 = smul.u32 2, %s25
        %v339 = vld [vmem:[%s327] sm:$0x77]
        %v340 = vld [vmem:[%s332] sm:$0x3]
        %v341 = vld [vmem:[%s2] sm:$0xff]
        %v342 = vld [vmem:[%s2 + $0x8] sm:$0xff]
        %v343 = vld [vmem:[%s2 + $0x10] sm:$0xff]
        %v344 = vld [vmem:[%s2 + $0x18] sm:$0xff]
        %v345 = vld [vmem:[%s2 + $0x20] sm:$0xff]
        %v346 = vld [vmem:[%s2 + $0x28] sm:$0xff]
        %v347 = vld [vmem:[%s2 + $0x30] sm:$0xff]
        %v348 = vld [vmem:[%s2 + $0x38] sm:$0xff]
        %v349 = vld [vmem:[%s4] sm:$0xff]
        %v350 = vld [vmem:[%s4 + $0x8] sm:$0xff]
        %v351 = vld [vmem:[%s4 + $0x10] sm:$0xff]
        %v352 = vld [vmem:[%s4 + $0x18] sm:$0xff]
        %v353 = vld [vmem:[%s4 + $0x20] sm:$0xff]
        %v354 = vld [vmem:[%s4 + $0x28] sm:$0xff]
        %v355 = vld [vmem:[%s4 + $0x30] sm:$0xff]
        %v356 = vld [vmem:[%s4 + $0x38] sm:$0xff]
        %358 = vset.pattern.permute.xlu0 0
        %359 = vperm.xlu0 %358, %v349
        %v360 = vpop.permute.xlu0 %359
        %363 = vset.pattern.permute.xlu0 0
        %364 = vperm.xlu0 %363, %v350
        %v365 = vpop.permute.xlu0 %364
        %368 = vset.pattern.permute.xlu0 0
        %369 = vperm.xlu0 %368, %v351
        %v370 = vpop.permute.xlu0 %369
        %373 = vset.pattern.permute.xlu0 0
        %374 = vperm.xlu0 %373, %v352
        %v375 = vpop.permute.xlu0 %374
        %378 = vset.pattern.permute.xlu0 0
        %379 = vperm.xlu0 %378, %v353
        %v380 = vpop.permute.xlu0 %379
        %383 = vset.pattern.permute.xlu0 0
        %384 = vperm.xlu0 %383, %v354
        %v385 = vpop.permute.xlu0 %384
        %388 = vset.pattern.permute.xlu0 0
        %389 = vperm.xlu0 %388, %v355
        %v390 = vpop.permute.xlu0 %389
        %393 = vset.pattern.permute.xlu0 0
        %394 = vperm.xlu0 %393, %v356
        %v395 = vpop.permute.xlu0 %394
        %398 = vst [vmem:[#allocation1] ss:$2 sm:$0xff] %v339
        %v399 = vld.sshfl [vmem:[#allocation1] sm:$0xff pattern:$0x75316420]
        %v400 = vld.sshfl [vmem:[#allocation1 + $0x8] sm:$0xff pattern:$0x75316420]
        %vm401 = vcmask 23552
        %v403 = vsel %vm401, %v341, 0
        %v406 = vsel %vm401, %v342, 0
        %v409 = vsel %vm401, %v343, 0
        %v412 = vsel %vm401, %v344, 0
        %v415 = vsel %vm401, %v345, 0
        %v418 = vsel %vm401, %v346, 0
        %v421 = vsel %vm401, %v347, 0
        %v424 = vsel %vm401, %v348, 0
        %vm426 = vcmask 1042432
        %v427 = vsel %vm426, %v399, 0
        %v429 = vsel %vm426, %v400, 0
        %431 = vmatpush.msra.mxu0 0.0
        %432 = vmatpush.msra.mxu0 0.0
        %433 = vmatpush.msra.mxu0 0.0
        %434 = vmatpush.msra.mxu0 0.0
        %435 = vmatpush.msra.mxu0 0.0
        %436 = vmatpush.msra.mxu0 0.0
        %437 = vmatpush.msra.mxu0 0.0
        %438 = vmatpush.msra.mxu0 0.0
        %439 = vmatpush.msra.mxu0 0.0
        %440 = vmatpush.msra.mxu0 0.0
        %441 = vmatpush.msra.mxu0 0.0
        %442 = vmatpush.msra.mxu0 0.0
        %443 = vmatpush.msra.mxu0 0.0
        %444 = vmatpush.msra.mxu0 0.0
        %445 = vmatpush.msra.mxu0 0.0
        %446 = vmatpush.msra.mxu0 %v427
        %447 = vmatmul.f32.gmra.mxu0 %v403
        %v448 = vpop.f32.mrf.mxu0
        %v449 = vadd.f32 %v360, %v448
        %450 = vmatmul.f32.gmra.mxu0 %v406
        %v451 = vpop.f32.mrf.mxu0
        %v452 = vadd.f32 %v365, %v451
        %453 = vmatmul.f32.gmra.mxu0 %v409
        %v454 = vpop.f32.mrf.mxu0
        %v455 = vadd.f32 %v370, %v454
        %456 = vmatmul.f32.gmra.mxu0 %v412
        %v457 = vpop.f32.mrf.mxu0
        %v458 = vadd.f32 %v375, %v457
        %459 = vmatmul.f32.gmra.mxu0 %v415
        %v460 = vpop.f32.mrf.mxu0
        %v461 = vadd.f32 %v380, %v460
        %462 = vmatmul.f32.gmra.mxu0 %v418
        %v463 = vpop.f32.mrf.mxu0
        %v464 = vadd.f32 %v385, %v463
        %465 = vmatmul.f32.gmra.mxu0 %v421
        %v466 = vpop.f32.mrf.mxu0
        %v467 = vadd.f32 %v390, %v466
        %468 = vmatmul.f32.gmra.mxu0 %v424
        %v469 = vpop.f32.mrf.mxu0
        %v470 = vadd.f32 %v395, %v469
        %471 = vdwg.mxu0
        %472 = vmatpush.msra.mxu0 0.0
        %473 = vmatpush.msra.mxu0 0.0
        %474 = vmatpush.msra.mxu0 0.0
        %475 = vmatpush.msra.mxu0 0.0
        %476 = vmatpush.msra.mxu0 0.0
        %477 = vmatpush.msra.mxu0 0.0
        %478 = vmatpush.msra.mxu0 0.0
        %479 = vmatpush.msra.mxu0 0.0
        %480 = vmatpush.msra.mxu0 0.0
        %481 = vmatpush.msra.mxu0 0.0
        %482 = vmatpush.msra.mxu0 0.0
        %483 = vmatpush.msra.mxu0 0.0
        %484 = vmatpush.msra.mxu0 0.0
        %485 = vmatpush.msra.mxu0 0.0
        %486 = vmatpush.msra.mxu0 0.0
        %487 = vmatpush.msra.mxu0 %v429
        %488 = vmatmul.f32.gmra.mxu0 %v403
        %v489 = vpop.f32.mrf.mxu0
        %v490 = vadd.f32 %v360, %v489
        %491 = vmatmul.f32.gmra.mxu0 %v406
        %v492 = vpop.f32.mrf.mxu0
        %v493 = vadd.f32 %v365, %v492
        %494 = vmatmul.f32.gmra.mxu0 %v409
        %v495 = vpop.f32.mrf.mxu0
        %v496 = vadd.f32 %v370, %v495
        %497 = vmatmul.f32.gmra.mxu0 %v412
        %v498 = vpop.f32.mrf.mxu0
        %v499 = vadd.f32 %v375, %v498
        %500 = vmatmul.f32.gmra.mxu0 %v415
        %v501 = vpop.f32.mrf.mxu0
        %v502 = vadd.f32 %v380, %v501
        %503 = vmatmul.f32.gmra.mxu0 %v418
        %v504 = vpop.f32.mrf.mxu0
        %v505 = vadd.f32 %v385, %v504
        %506 = vmatmul.f32.gmra.mxu0 %v421
        %v507 = vpop.f32.mrf.mxu0
        %v508 = vadd.f32 %v390, %v507
        %509 = vmatmul.f32.gmra.mxu0 %v424
        %v510 = vpop.f32.mrf.mxu0
        %v511 = vadd.f32 %v395, %v510
        %512 = vdwg.mxu0
        %v513 = vmul.f32 %v449, 0.5
        %v514 = vmul.f32 %v490, 0.5
        %v515 = vmul.f32 %v452, 0.5
        %v516 = vmul.f32 %v493, 0.5
        %v517 = vmul.f32 %v455, 0.5
        %v518 = vmul.f32 %v496, 0.5
        %v519 = vmul.f32 %v458, 0.5
        %v520 = vmul.f32 %v499, 0.5
        %v521 = vmul.f32 %v461, 0.5
        %v522 = vmul.f32 %v502, 0.5
        %v523 = vmul.f32 %v464, 0.5
        %v524 = vmul.f32 %v505, 0.5
        %v525 = vmul.f32 %v467, 0.5
        %v526 = vmul.f32 %v508, 0.5
        %v527 = vmul.f32 %v470, 0.5
        %v528 = vmul.f32 %v511, 0.5
        %v529 = vtanh.pop %v513
        %v530 = vtanh.pop %v514
        %v531 = vtanh.pop %v515
        %v532 = vtanh.pop %v516
        %v533 = vtanh.pop %v517
        %v534 = vtanh.pop %v518
        %v535 = vtanh.pop %v519
        %v536 = vtanh.pop %v520
        %v537 = vtanh.pop %v521
        %v538 = vtanh.pop %v522
        %v539 = vtanh.pop %v523
        %v540 = vtanh.pop %v524
        %v541 = vtanh.pop %v525
        %v542 = vtanh.pop %v526
        %v543 = vtanh.pop %v527
        %v544 = vtanh.pop %v528
        %v545 = vmul.f32 %v529, 0.5
        %v546 = vmul.f32 %v530, 0.5
        %v547 = vmul.f32 %v531, 0.5
        %v548 = vmul.f32 %v532, 0.5
        %v549 = vmul.f32 %v533, 0.5
        %v550 = vmul.f32 %v534, 0.5
        %v551 = vmul.f32 %v535, 0.5
        %v552 = vmul.f32 %v536, 0.5
        %v553 = vmul.f32 %v537, 0.5
        %v554 = vmul.f32 %v538, 0.5
        %v555 = vmul.f32 %v539, 0.5
        %v556 = vmul.f32 %v540, 0.5
        %v557 = vmul.f32 %v541, 0.5
        %v558 = vmul.f32 %v542, 0.5
        %v559 = vmul.f32 %v543, 0.5
        %v560 = vmul.f32 %v544, 0.5
        %v561 = vadd.f32 %v545, 0.5
        %v562 = vadd.f32 %v546, 0.5
        %v563 = vadd.f32 %v547, 0.5
        %v564 = vadd.f32 %v548, 0.5
        %v565 = vadd.f32 %v549, 0.5
        %v566 = vadd.f32 %v550, 0.5
        %v567 = vadd.f32 %v551, 0.5
        %v568 = vadd.f32 %v552, 0.5
        %v569 = vadd.f32 %v553, 0.5
        %v570 = vadd.f32 %v554, 0.5
        %v571 = vadd.f32 %v555, 0.5
        %v572 = vadd.f32 %v556, 0.5
        %v573 = vadd.f32 %v557, 0.5
        %v574 = vadd.f32 %v558, 0.5
        %v575 = vadd.f32 %v559, 0.5
        %v576 = vadd.f32 %v560, 0.5
        %v577 = vmul.f32 %v449, %v561
        %v578 = vmul.f32 %v490, %v562
        %v579 = vmul.f32 %v452, %v563
        %v580 = vmul.f32 %v493, %v564
        %v581 = vmul.f32 %v455, %v565
        %v582 = vmul.f32 %v496, %v566
        %v583 = vmul.f32 %v458, %v567
        %v584 = vmul.f32 %v499, %v568
        %v585 = vmul.f32 %v461, %v569
        %v586 = vmul.f32 %v502, %v570
        %v587 = vmul.f32 %v464, %v571
        %v588 = vmul.f32 %v505, %v572
        %v589 = vmul.f32 %v467, %v573
        %v590 = vmul.f32 %v508, %v574
        %v591 = vmul.f32 %v470, %v575
        %v592 = vmul.f32 %v511, %v576
        %v593 = vld [vmem:[%s5] sm:$0xff]
        %v594 = vld [vmem:[%s5 + $0x8] sm:$0xff]
        %v595 = vld [vmem:[%s5 + $0x10] sm:$0xff]
        %v596 = vld [vmem:[%s5 + $0x18] sm:$0xff]
        %v597 = vld [vmem:[%s5 + $0x20] sm:$0xff]
        %v598 = vld [vmem:[%s5 + $0x28] sm:$0xff]
        %v599 = vld [vmem:[%s5 + $0x30] sm:$0xff]
        %v600 = vld [vmem:[%s5 + $0x38] sm:$0xff]
        %602 = vset.pattern.permute.xlu0 0
        %603 = vperm.xlu0 %602, %v593
        %v604 = vpop.permute.xlu0 %603
        %607 = vset.pattern.permute.xlu0 0
        %608 = vperm.xlu0 %607, %v594
        %v609 = vpop.permute.xlu0 %608
        %612 = vset.pattern.permute.xlu0 0
        %613 = vperm.xlu0 %612, %v595
        %v614 = vpop.permute.xlu0 %613
        %617 = vset.pattern.permute.xlu0 0
        %618 = vperm.xlu0 %617, %v596
        %v619 = vpop.permute.xlu0 %618
        %622 = vset.pattern.permute.xlu0 0
        %623 = vperm.xlu0 %622, %v597
        %v624 = vpop.permute.xlu0 %623
        %627 = vset.pattern.permute.xlu0 0
        %628 = vperm.xlu0 %627, %v598
        %v629 = vpop.permute.xlu0 %628
        %632 = vset.pattern.permute.xlu0 0
        %633 = vperm.xlu0 %632, %v599
        %v634 = vpop.permute.xlu0 %633
        %637 = vset.pattern.permute.xlu0 0
        %638 = vperm.xlu0 %637, %v600
        %v639 = vpop.permute.xlu0 %638
        %v641 = vmul.f32 %v577, %v604
        %v642 = vmul.f32 %v578, %v604
        %v643 = vmul.f32 %v579, %v609
        %v644 = vmul.f32 %v580, %v609
        %v645 = vmul.f32 %v581, %v614
        %v646 = vmul.f32 %v582, %v614
        %v647 = vmul.f32 %v583, %v619
        %v648 = vmul.f32 %v584, %v619
        %v649 = vmul.f32 %v585, %v624
        %v650 = vmul.f32 %v586, %v624
        %v651 = vmul.f32 %v587, %v629
        %v652 = vmul.f32 %v588, %v629
        %v653 = vmul.f32 %v589, %v634
        %v654 = vmul.f32 %v590, %v634
        %v655 = vmul.f32 %v591, %v639
        %v656 = vmul.f32 %v592, %v639
        %v657 = vadd.f32 %v641, %v643
        %v658 = vadd.f32 %v657, %v645
        %v659 = vadd.f32 %v658, %v647
        %v660 = vadd.f32 %v659, %v649
        %v661 = vadd.f32 %v660, %v651
        %v662 = vadd.f32 %v661, %v653
        %v663 = vadd.f32 %v662, %v655
        %v664 = vrot.slane %v663, 4
        %v665 = vadd.f32 %v663, %v664
        %v666 = vrot.slane %v665, 2
        %v667 = vadd.f32 %v665, %v666
        %v668 = vrot.slane %v667, 1
        %v669 = vadd.f32 %v667, %v668
        %v670 = vadd.f32 %v642, %v644
        %v671 = vadd.f32 %v670, %v646
        %v672 = vadd.f32 %v671, %v648
        %v673 = vadd.f32 %v672, %v650
        %v674 = vadd.f32 %v673, %v652
        %v675 = vadd.f32 %v674, %v654
        %v676 = vadd.f32 %v675, %v656
        %v677 = vrot.slane %v676, 4
        %v678 = vadd.f32 %v676, %v677
        %v679 = vrot.slane %v678, 2
        %v680 = vadd.f32 %v678, %v679
        %v681 = vrot.slane %v680, 1
        %v682 = vadd.f32 %v680, %v681
        %v683 = vld [vmem:[#allocation2] sm:$0x1]
        %685 = vset.pattern.permute.xlu0 0
        %686 = vperm.xlu0 %685, %v683
        %v687 = vpop.permute.xlu0 %686
        %v689 = vperm.slane %v687, 0
        %v690 = vadd.f32 %v669, %v689
        %v691 = vadd.f32 %v682, %v689
        %v692 = vlaneseq
        %v693 = vshrl.u32 %v692, 7
        %v694 = vperm.slane %v340, 0
        %v695 = vperm.slane %v340, 1
        %vm696 = vcmp.eq.s32.totalorder %v693, %v694
        %vm697 = vcmp.eq.s32.totalorder %v693, %v695
        %v698 = vsel %vm696, 1, 0
        %v699 = vsel %vm697, 1, 0
        %v700 = vcvt.s32.f32 %v698
        %v701 = vcvt.s32.f32 %v699
        %v702 = vmul.f32 %v700, %v690
        %v703 = vmul.f32 %v701, %v691
        %vm704 = vcmask 1041408
        %v705 = vsel %vm704, %v702, 0.0
        %v706 = vsel %vm704, %v703, 0.0
        %v707 = vadd.f32 %v705, %v706
        %708 = vadd.xlane.f32.xlu0 %v707
        %v709 = vpop.xlane.xlu0 %708
        %vm710 = vcmask 1024
        %711 = vst.msk [vmem:[%s337] sm:$0x3] %vm710, %v709
        %v712 = vsub.f32 1.0, %v561
        %v713 = vsub.f32 1.0, %v562
        %v714 = vsub.f32 1.0, %v563
        %v715 = vsub.f32 1.0, %v564
        %v716 = vsub.f32 1.0, %v565
        %v717 = vsub.f32 1.0, %v566
        %v718 = vsub.f32 1.0, %v567
        %v719 = vsub.f32 1.0, %v568
        %v720 = vsub.f32 1.0, %v569
        %v721 = vsub.f32 1.0, %v570
        %v722 = vsub.f32 1.0, %v571
        %v723 = vsub.f32 1.0, %v572
        %v724 = vsub.f32 1.0, %v573
        %v725 = vsub.f32 1.0, %v574
        %v726 = vsub.f32 1.0, %v575
        %v727 = vsub.f32 1.0, %v576
        %v728 = vmul.f32 %v577, %v712
        %v729 = vmul.f32 %v578, %v713
        %v730 = vmul.f32 %v579, %v714
        %v731 = vmul.f32 %v580, %v715
        %v732 = vmul.f32 %v581, %v716
        %v733 = vmul.f32 %v582, %v717
        %v734 = vmul.f32 %v583, %v718
        %v735 = vmul.f32 %v584, %v719
        %v736 = vmul.f32 %v585, %v720
        %v737 = vmul.f32 %v586, %v721
        %v738 = vmul.f32 %v587, %v722
        %v739 = vmul.f32 %v588, %v723
        %v740 = vmul.f32 %v589, %v724
        %v741 = vmul.f32 %v590, %v725
        %v742 = vmul.f32 %v591, %v726
        %v743 = vmul.f32 %v592, %v727
        %v744 = vadd.f32 %v561, %v728
        %v745 = vadd.f32 %v562, %v729
        %v746 = vadd.f32 %v563, %v730
        %v747 = vadd.f32 %v564, %v731
        %v748 = vadd.f32 %v565, %v732
        %v749 = vadd.f32 %v566, %v733
        %v750 = vadd.f32 %v567, %v734
        %v751 = vadd.f32 %v568, %v735
        %v752 = vadd.f32 %v569, %v736
        %v753 = vadd.f32 %v570, %v737
        %v754 = vadd.f32 %v571, %v738
        %v755 = vadd.f32 %v572, %v739
        %v756 = vadd.f32 %v573, %v740
        %v757 = vadd.f32 %v574, %v741
        %v758 = vadd.f32 %v575, %v742
        %v759 = vadd.f32 %v576, %v743
        %v760 = vld [vmem:[%s3] sm:$0x7]
        %vm761 = vcmask 523264
        %v763 = vsel %vm761, %v760, 0
        %765 = vmatpush.msra.mxu0 0.0
        %766 = vmatpush.msra.mxu0 0.0
        %767 = vmatpush.msra.mxu0 0.0
        %768 = vmatpush.msra.mxu0 0.0
        %769 = vmatpush.msra.mxu0 0.0
        %770 = vmatpush.msra.mxu0 0.0
        %771 = vmatpush.msra.mxu0 0.0
        %772 = vmatpush.msra.mxu0 0.0
        %773 = vmatpush.msra.mxu0 %v758
        %774 = vmatpush.msra.mxu0 %v756
        %775 = vmatpush.msra.mxu0 %v754
        %776 = vmatpush.msra.mxu0 %v752
        %777 = vmatpush.msra.mxu0 %v750
        %778 = vmatpush.msra.mxu0 %v748
        %779 = vmatpush.msra.mxu0 %v746
        %780 = vmatpush.msra.mxu0 %v744
        %781 = vmatmul.f32.gmra.mxu0 %v763
        %v782 = vpop.f32.mrf.mxu0
        %v783 = vadd.f32 0.0, %v782
        %784 = vdwg.mxu0
        %785 = vmatpush.msra.mxu0 0.0
        %786 = vmatpush.msra.mxu0 0.0
        %787 = vmatpush.msra.mxu0 0.0
        %788 = vmatpush.msra.mxu0 0.0
        %789 = vmatpush.msra.mxu0 0.0
        %790 = vmatpush.msra.mxu0 0.0
        %791 = vmatpush.msra.mxu0 0.0
        %792 = vmatpush.msra.mxu0 0.0
        %793 = vmatpush.msra.mxu0 %v759
        %794 = vmatpush.msra.mxu0 %v757
        %795 = vmatpush.msra.mxu0 %v755
        %796 = vmatpush.msra.mxu0 %v753
        %797 = vmatpush.msra.mxu0 %v751
        %798 = vmatpush.msra.mxu0 %v749
        %799 = vmatpush.msra.mxu0 %v747
        %800 = vmatpush.msra.mxu0 %v745
        %801 = vmatmul.f32.gmra.mxu0 %v763
        %v802 = vpop.f32.mrf.mxu0
        %v803 = vadd.f32 0.0, %v802
        %804 = vdwg.mxu0
        %v807 = vrot.slane %v803, 4
        %vm808 = vcmask 1043456
        %v809 = vsel %vm808, %v783, %v807
        %811 = vst [vmem:[%s322] sm:$0x77] %v809
        %p812 = scmp.lt.s32.totalorder %s25, 1
        %s813 = scalar_select %p812, %s25, 1
        %s814 = smul.addr %s813, 2
        %s815 = scalar_lea.vmem %s7, %s814
        %s816 = sand.u32 %s216, 1
        %s817 = scalar_lea.sflag [#allocation4], %s816
        %s818 = sand.u32 %s216, 1
        %s819 = smul.addr %s818, 8
        %s820 = scalar_lea.vmem [#allocation3], %s819
        // Predicated region
        $region49: #{tpu_custom_call.1} parent=47 // pred_check
          %p821 = pneg %p200
        $region50: #{tpu_custom_call.1} parent=47 // pred_check_branch
          %823 = sbr.rel (%p821) target = $region52
        $region51: #{tpu_custom_call.1} parent=47 // pred_region
          _
        $region52: #{tpu_custom_call.1} parent=47 // pred_fallthru
          _
        // Predicated region
        $region53: #{tpu_custom_call.1} parent=47 // pred_check
          %p824 = pneg %p226
        $region54: #{tpu_custom_call.1} parent=47 // pred_check_branch
          %826 = sbr.rel (%p824) target = $region56
        $region55: #{tpu_custom_call.1} parent=47 // pred_region
          %s827 = smul.u32 2, %s25
          %829 = vsyncadd %s817, 0
          %s830 = smul.addr %s827, 4
          %s831 = scalar_lea.hbm %s8, %s830
          %s833 = sshll.u32 %s820, 4
          %s834 = int_to_ptr.vmem [resolvable:$true] %s833
          %s835 = sshll.u32 %s831, 4
          %s836 = int_to_ptr.hbm [resolvable:$true] %s835
          %838 = dma.vmem_to_hbm [thread:$0]  %s834, 128, %s836, %s817
        $region56: #{tpu_custom_call.1} parent=47 // pred_fallthru
          _
      $region48: #{tpu_custom_call.1} parent=5 // pred_fallthru
        _
      %p839 = scmp.le.s32.totalorder 2, %s20
      // Predicated region
      $region57: #{tpu_custom_call.1} parent=5 // pred_check
        %p840 = pneg %p839
      $region58: #{tpu_custom_call.1} parent=5 // pred_check_branch
        %842 = sbr.rel (%p840) target = $region60
      $region59: #{tpu_custom_call.1} parent=5 // pred_region
        %s843 = ssub.s32 %s20, 2
        // Predicated region
        $region61: #{tpu_custom_call.1} parent=59 // pred_check
          %p844 = pneg %p206
        $region62: #{tpu_custom_call.1} parent=59 // pred_check_branch
          %846 = sbr.rel (%p844) target = $region64
        $region63: #{tpu_custom_call.1} parent=59 // pred_region
          %p847 = scmp.lt.s32.totalorder %s26, 1
          %s848 = scalar_select %p847, %s26, 1
          %s849 = smul.addr %s848, 2
          %s850 = scalar_lea.vmem %s7, %s849
        $region64: #{tpu_custom_call.1} parent=59 // pred_fallthru
          _
        // Predicated region
        $region65: #{tpu_custom_call.1} parent=59 // pred_check
          %p851 = pneg %p232
        $region66: #{tpu_custom_call.1} parent=59 // pred_check_branch
          %853 = sbr.rel (%p851) target = $region68
        $region67: #{tpu_custom_call.1} parent=59 // pred_region
          %s854 = sand.u32 %s217, 1
          %s855 = scalar_lea.sflag [#allocation4], %s854
          %s856 = sand.u32 %s217, 1
          %s857 = smul.addr %s856, 8
          %s858 = scalar_lea.vmem [#allocation3], %s857
          %860 = dma.done %s855, 128
        $region68: #{tpu_custom_call.1} parent=59 // pred_fallthru
          _
      $region60: #{tpu_custom_call.1} parent=5 // pred_fallthru
        _
    $region6: #{tpu_custom_call.1} parent=1 // loop_footer
      %s24 = sadd.s32 1, %s20
    $region7: #{tpu_custom_call.1} parent=1 // loop_footer_branch
      %19 = sbr.rel target = $region3
    $region8: #{tpu_custom_call.1} parent=1 // loop_exit
      _
    %861 = vsyncpa [#allocation4], 1
    %s862 = scalar_lea.sflag [#allocation4], 1
    %863 = vsyncpa %s862, 1

</llo_original>
